<compile_context>
chip_gen: v7x
topology: tpu7x:2x2x1
jax: 0.10.0
libtpu: 0.0.40
codegen_flags: <defaults>
</compile_context>

<pallas_src>
import jax
import jax.numpy as jnp
from jax.experimental import pallas as pl
from jax.experimental.pallas import tpu as pltpu

_LANES = 128


def _min_value(dtype):
    dtype = jnp.dtype(dtype)
    if jnp.issubdtype(dtype, jnp.floating):
        return float("-inf")
    if jnp.issubdtype(dtype, jnp.integer):
        return int(jnp.iinfo(dtype).min)
    raise ValueError(f"unsupported dtype for max pooling: {dtype}")


def _round_up(x, m):
    return ((x + m - 1) // m) * m


def _largest_divisor_leq(n, cap):
    cap = max(1, min(n, cap))
    for d in range(cap, 0, -1):
        if n % d == 0:
            return d
    return 1


def _make_kernel(min_val):
    def kernel(x_ref, o_ref):
        # x_ref: (bb, t_tile, c_tile) VMEM tile.
        # o_ref: (1, bb, c_tile) VMEM-resident accumulator (revisited across k).
        @pl.when(pl.program_id(3) == 0)
        def _():
            o_ref[...] = jnp.full(o_ref.shape, min_val, o_ref.dtype)

        blk = jnp.max(x_ref[...], axis=1)              # (bb, c_tile)
        o_ref[...] = jnp.maximum(o_ref[...], blk[None])

    return kernel


def global_max_pooling(x, *, t_tile=None,
                       block_bytes=8 * 1024 * 1024,
                       vmem_limit_bytes=40 * 1024 * 1024,
                       min_pallas_bytes=128 * 1024):
    """x: (B, T, C) -> (B, C), max over T (PyTorch GlobalMaxPooling forward)."""
    B, T, C = x.shape
    dtype = x.dtype
    itemsize = jnp.dtype(dtype).itemsize

    # Tiny-problem fast path: launch + per-step overhead dominates; XLA's fused
    # reduce is already optimal.
    if B * T * C * itemsize <= min_pallas_bytes:
        return jnp.max(x, axis=1)

    # ---- Lane folding for narrow C (only when it is a zero-copy reshape). ----
    fold = 1
    if C < _LANES and _LANES % C == 0 and T % (_LANES // C) == 0:
        fold = _LANES // C
    x_eff = x.reshape(B, T // fold, fold * C) if fold > 1 else x
    _, t_eff, c_eff = x_eff.shape

    sub = max(8, 32 // itemsize)          # sublane rows: 8 f32 / 16 bf16 / 32 i8

    # ---- C (lane) tiling: only when even `sub` rows of full C exceed budget. ----
    c_pad = _round_up(c_eff, _LANES)      # VMEM lane padding for narrow C
    if c_eff % _LANES == 0 and sub * c_pad * itemsize > block_bytes:
        max_lanes = max(_LANES, (block_bytes // (sub * itemsize)) // _LANES * _LANES)
        c_tile, c = _LANES, _LANES
        while c <= max_lanes:
            if c_eff % c == 0:
                c_tile = c
            c += _LANES
    else:
        c_tile = c_eff
    num_c = c_eff // c_tile
    c_tile_pad = _round_up(c_tile, _LANES)

    # ---- T tiling: ~block_bytes tiles; prefer a divisor of t_eff (no tail). ----
    rows_budget = max(sub, block_bytes // (c_tile_pad * itemsize))
    if t_tile is not None:
        t_tile = int(t_tile)
        t_tile = t_eff if t_tile >= t_eff else max(sub, (t_tile // sub) * sub)
    elif rows_budget >= t_eff:
        t_tile = t_eff
    else:
        target = max(sub, (rows_budget // sub) * sub)
        t_tile = target
        t = target
        while t >= max(sub, target // 2):
            if t_eff % t == 0:
                t_tile = t
                break
            t -= sub
    num_k_full = max(1, t_eff // t_tile)

    # ---- Batch blocking: pack several batch rows per step when T is short. ----
    bb = _largest_divisor_leq(B, rows_budget // t_tile)
    b_blocks = B // bb

    # ---- Cross-core split of the reduction when nothing else is parallel. ----
    split = 2 if (b_blocks * num_c == 1 and num_k_full >= 4) else 1
    num_k = num_k_full // split
    t_cov = split * num_k * t_tile        # rows covered by the Pallas kernel

    min_val = _min_value(dtype)
    kernel = _make_kernel(min_val)

    def x_index_map(s, b, c, k):
        return (b, s * num_k + k, c)

    def o_index_map(s, b, c, k):
        return (s, b, c)

    cost = pl.CostEstimate(
        flops=B * t_eff * c_eff,          # one compare per element (advisory)
        transcendentals=0,
        bytes_accessed=(B * t_eff * c_eff + split * B * c_eff) * itemsize,
    )

    out_part = pl.pallas_call(
        kernel,
        out_shape=jax.ShapeDtypeStruct((split, B, c_eff), dtype),
        grid_spec=pltpu.PrefetchScalarGridSpec(
            num_scalar_prefetch=0,
            grid=(split, b_blocks, num_c, num_k),   # reduction axis last
            in_specs=[
                pl.BlockSpec((bb, t_tile, c_tile), x_index_map),
            ],
            out_specs=pl.BlockSpec((1, bb, c_tile), o_index_map),
        ),
        compiler_params=pltpu.CompilerParams(
            dimension_semantics=("parallel", "parallel", "parallel", "arbitrary"),
            vmem_limit_bytes=vmem_limit_bytes,
        ),
        cost_estimate=cost,
    )(x_eff)

    out_eff = jnp.max(out_part, axis=0)   # combine cross-core partials -> (B, c_eff)

    # Ragged-T tail (rows not covered by the kernel): tiny fused XLA reduce.
    if t_cov < t_eff:
        out_eff = jnp.maximum(out_eff, jnp.max(x_eff[:, t_cov:, :], axis=1))

    if fold > 1:
        out_eff = jnp.max(out_eff.reshape(B, fold, C), axis=1)
    return out_eff


def _reference(x):
    # Pure-JAX reference mirroring the PyTorch forward.
    return jnp.max(x, axis=1)


if __name__ == "__main__":
    key = jax.random.PRNGKey(0)
    keys = jax.random.split(key, 7)

    cases = []

    # 1) Spec-style tiny input (B=2, T=8, C=32): XLA fast path.
    x_tiny = jax.random.normal(keys[0], (2, 8, 32), dtype=jnp.float32)
    cases.append(("tiny_fastpath", x_tiny, global_max_pooling(x_tiny)))

    # 2) Same tiny input forced through Pallas (C=32 -> 128-lane fold).
    cases.append(("tiny_pallas", x_tiny,
                  global_max_pooling(x_tiny, min_pallas_bytes=0)))

    # 3) Multi-block reduction with a ragged T tail handled in the wrapper.
    x_rag = jax.random.normal(keys[1], (2, 200, 256), dtype=jnp.float32)
    cases.append(("ragged_tail", x_rag,
                  global_max_pooling(x_rag, t_tile=64, min_pallas_bytes=0)))

    # 4) Single-batch input: cross-core split of the reduction (split=2).
    x_split = jax.random.normal(keys[2], (1, 512, 256), dtype=jnp.float32)
    cases.append(("core_split", x_split,
                  global_max_pooling(x_split, t_tile=128, min_pallas_bytes=0)))

    # 5) bf16 with lane folding + wrapper tail.
    x_bf16 = jax.random.normal(keys[3], (3, 96, 64),
                               dtype=jnp.float32).astype(jnp.bfloat16)
    cases.append(("bf16_folded", x_bf16,
                  global_max_pooling(x_bf16, t_tile=32, min_pallas_bytes=0)))

    # 6) Short-T / many-B: batch blocking (bb=8 rows per grid step).
    x_batch = jax.random.normal(keys[4], (8, 16, 128), dtype=jnp.float32)
    cases.append(("batch_block", x_batch,
                  global_max_pooling(x_batch, min_pallas_bytes=0)))

    # 7) Narrow C with T not divisible by 128//C: narrow (lane-padded) path.
    x_narrow = jax.random.normal(keys[5], (2, 10, 32), dtype=jnp.float32)
    cases.append(("narrow_nofold", x_narrow,
                  global_max_pooling(x_narrow, min_pallas_bytes=0)))

    for name, x, out in cases:
        out = jax.block_until_ready(out)
        ref = _reference(x)
        assert out.shape == ref.shape, (name, out.shape, ref.shape)
        assert out.dtype == x.dtype, (name, out.dtype, x.dtype)
        assert jnp.array_equal(out, ref), f"mismatch vs reference: {name}"

    print("KERNEL_OK")
</pallas_src>

<mosaic_0001>
module attributes {stable_mosaic.version = 11 : i64} {
  func.func @kernel(%arg0: i32, %arg1: i32, %arg2: i32, %arg3: i32, %arg4: memref<2x2x128xf32, #tpu.memory_space<vmem>>, %arg5: memref<1x2x128xf32, #tpu.memory_space<vmem>>) attributes {dimension_semantics = [#tpu.dimension_semantics<parallel>, #tpu.dimension_semantics<parallel>, #tpu.dimension_semantics<parallel>, #tpu.dimension_semantics<arbitrary>], iteration_bounds = array<i64: 1, 1, 1, 1>, scalar_prefetch = 0 : i64, scratch_operands = 0 : i64, tpu.core_type = #tpu.core_type<tc>, window_params = [{transform_indices = @transform_0, window_bounds = array<i64: 2, 2, 128>}, {transform_indices = @transform_1, window_bounds = array<i64: 1, 2, 128>}]} {
    %c0_i32 = arith.constant 0 : i32
    %0 = arith.cmpi eq, %arg3, %c0_i32 : i32
    %1 = arith.extui %0 : i1 to i32
    %c0_i32_0 = arith.constant 0 : i32
    %2 = arith.cmpi ne, %1, %c0_i32_0 : i32
    scf.if %2 {
      %cst_9 = arith.constant 0xFF800000 : f32
      %9 = vector.broadcast %cst_9 : f32 to vector<1x2x128xf32>
      %c0_10 = arith.constant 0 : index
      %c0_11 = arith.constant 0 : index
      %c0_12 = arith.constant 0 : index
      %10 = vector.load %arg5[%c0_10, %c0_11, %c0_12] : memref<1x2x128xf32, #tpu.memory_space<vmem>>, vector<1x2x128xf32>
      tpu.vector_store %arg5[%c0_10, %c0_11, %c0_12], %9 {strides = array<i32>} : memref<1x2x128xf32, #tpu.memory_space<vmem>>, vector<1x2x128xf32>,
    } else {
    }
    %c0 = arith.constant 0 : index
    %c0_1 = arith.constant 0 : index
    %c0_2 = arith.constant 0 : index
    %3 = vector.load %arg4[%c0, %c0_1, %c0_2] : memref<2x2x128xf32, #tpu.memory_space<vmem>>, vector<2x2x128xf32>
    %cst = arith.constant dense<0xFF800000> : vector<2x128xf32>
    %4 = vector.multi_reduction <maximumf>, %3, %cst [1] : vector<2x2x128xf32> to vector<2x128xf32>
    %c0_3 = arith.constant 0 : index
    %c0_4 = arith.constant 0 : index
    %c0_5 = arith.constant 0 : index
    %5 = vector.load %arg5[%c0_3, %c0_4, %c0_5] : memref<1x2x128xf32, #tpu.memory_space<vmem>>, vector<1x2x128xf32>
    %6 = vector.shape_cast %4 : vector<2x128xf32> to vector<1x2x128xf32>
    %7 = arith.maximumf %5, %6 : vector<1x2x128xf32>
    %c0_6 = arith.constant 0 : index
    %c0_7 = arith.constant 0 : index
    %c0_8 = arith.constant 0 : index
    %8 = vector.load %arg5[%c0_6, %c0_7, %c0_8] : memref<1x2x128xf32, #tpu.memory_space<vmem>>, vector<1x2x128xf32>
    tpu.vector_store %arg5[%c0_6, %c0_7, %c0_8], %7 {strides = array<i32>} : memref<1x2x128xf32, #tpu.memory_space<vmem>>, vector<1x2x128xf32>,
    return
  }
  func.func @transform_0(%arg0: i32, %arg1: i32, %arg2: i32, %arg3: i32) -> (i32, i32, i32) {
    %c1_i32 = arith.constant 1 : i32
    %0 = arith.muli %arg0, %c1_i32 : i32
    %1 = arith.addi %0, %arg3 : i32
    %c0_i32 = arith.constant 0 : i32
    return %arg1, %1, %arg2 : i32, i32, i32
  }
  func.func @transform_1(%arg0: i32, %arg1: i32, %arg2: i32, %arg3: i32) -> (i32, i32, i32) {
    %c0_i32 = arith.constant 0 : i32
    return %arg0, %arg1, %arg2 : i32, i32, i32
  }
}

</mosaic_0001>

<llo_original>
// kernel: tpu_custom_call.1
$region0: #{tpu_custom_call.1}
  #allocation0 [shape = 'u32[]', space=smem, size = 0x4, offset = 0x4, fixed_abs, tag = 'smem constant byte address 0x4 - core index']
  #allocation1 [shape = 'u32[144,128]{1,0:T(1,128)}', space=vmem, size = 0x12000, scoped, tag = 'internal scratch']
  %s0 = inlined_call_operand.hbm [shape: f32[2,2,128], index: 0, kind: input, shape index: {}]
  %s1 = inlined_call_operand.hbm [shape: f32[1,2,128], index: 1, kind: output, shape index: {}]
  %s2 = sld [smem:[#allocation0]]
  $region22: #{tpu_custom_call.1} parent=0
    _
  %s4 = ssub.s32 1, %s2
  %s5 = scalar_select 0, %s4, %s2
  $region1: #{tpu_custom_call.1} parent=0
    #allocation2 [shape = 'u8[2048]{0}', space=vmem, size = 0x800, scoped, tag = 'input window, operand 0, single buffered']
    #allocation3 [shape = 's32[1]{0}', space=sflag, size = 0x4, scoped, tag = 'scoped memory for tpu_custom_call.1']
    #allocation4 [shape = 's32[1]{0}', space=sflag, size = 0x4, scoped, tag = 'scoped memory for tpu_custom_call.1']
    #allocation5 [shape = 'u8[1024]{0}', space=vmem, size = 0x400, scoped, tag = 'output window, operand 0, single buffered']
    %6 = vsyncpa [#allocation3], 0
    %7 = vsyncpa [#allocation4], 0
    // Predicated region
    $region2: #{tpu_custom_call.1} parent=1 // pred_check
      _
    $region3: #{tpu_custom_call.1} parent=1 // pred_check_branch
      %9 = sbr.rel (0) target = $region5
    $region4: #{tpu_custom_call.1} parent=1 // pred_region
      %s10 = sadd.s32 0, 0
      %s12 = ssub.s32 64, 64
      %13 = vsyncadd [#allocation3], %s12
      %s14 = smul.addr %s10, 32
      %s15 = scalar_lea.hbm %s0, %s14
      %s16 = sshll.u32 [#allocation2], 4
      %s17 = int_to_ptr.vmem [resolvable:$true] %s16
      %22 = dma.hbm_to_vmem [thread:$0]  %s15, 64, %s17, [#allocation3], 32, 32, 2
    $region5: #{tpu_custom_call.1} parent=1 // pred_fallthru
      _
    // Predicated region
    $region6: #{tpu_custom_call.1} parent=1 // pred_check
      _
    $region7: #{tpu_custom_call.1} parent=1 // pred_check_branch
      %24 = sbr.rel (0) target = $region9
    $region8: #{tpu_custom_call.1} parent=1 // pred_region
      %25 = dma.done [#allocation3], 64
    $region9: #{tpu_custom_call.1} parent=1 // pred_fallthru
      _
    %s26 = sadd.s32 0, 0
    %p27 = scmp.eq.s32.totalorder 0, 0
    // Predicated region
    $region10: #{tpu_custom_call.1} parent=1 // pred_check
      %p28 = pneg %p27
    $region11: #{tpu_custom_call.1} parent=1 // pred_check_branch
      %30 = sbr.rel (%p28) target = $region13
    $region12: #{tpu_custom_call.1} parent=1 // pred_region
      %31 = vst [vmem:[#allocation5] sm:$0x3] -inf
    $region13: #{tpu_custom_call.1} parent=1 // pred_fallthru
      _
    %v32 = vld [vmem:[#allocation2] sm:$0x3]
    %v33 = vld [vmem:[#allocation2 + $0x2] sm:$0x3]
    %vm34 = vcmask 1041408
    %v35 = vsel %vm34, %v32, -inf
    %v36 = vrot.slane %v35, 4
    %v37 = vmax.f32 %v35, %v36
    %v38 = vrot.slane %v37, 2
    %v39 = vmax.f32 %v37, %v38
    %v40 = vrot.slane %v39, 1
    %v41 = vmax.f32 %v39, %v40
    %v42 = vsel %vm34, %v33, -inf
    %v43 = vrot.slane %v42, 4
    %v44 = vmax.f32 %v42, %v43
    %v45 = vrot.slane %v44, 2
    %v46 = vmax.f32 %v44, %v45
    %v47 = vrot.slane %v46, 1
    %v48 = vmax.f32 %v46, %v47
    %v49 = vld [vmem:[#allocation5] sm:$0x3]
    %vm52 = vcmask 1041409
    %v53 = vsel %vm52, %v48, %v41
    %v55 = vmax.f32 %v49, %v53
    %56 = vst [vmem:[#allocation5] sm:$0x3] %v55
    // Predicated region
    $region14: #{tpu_custom_call.1} parent=1 // pred_check
      _
    $region15: #{tpu_custom_call.1} parent=1 // pred_check_branch
      %58 = sbr.rel (0) target = $region17
    $region16: #{tpu_custom_call.1} parent=1 // pred_region
      %s60 = ssub.s32 32, 32
      %61 = vsyncadd [#allocation4], %s60
      %s63 = sshll.u32 [#allocation5], 4
      %s64 = int_to_ptr.vmem [resolvable:$true] %s63
      %66 = dma.vmem_to_hbm [thread:$0]  %s64, 32, %s1, [#allocation4]
    $region17: #{tpu_custom_call.1} parent=1 // pred_fallthru
      _
    // Predicated region
    $region18: #{tpu_custom_call.1} parent=1 // pred_check
      _
    $region19: #{tpu_custom_call.1} parent=1 // pred_check_branch
      %68 = sbr.rel (0) target = $region21
    $region20: #{tpu_custom_call.1} parent=1 // pred_region
      %69 = dma.done [#allocation4], 32
    $region21: #{tpu_custom_call.1} parent=1 // pred_fallthru
      _
    %70 = vsyncpa [#allocation3], 1
    %71 = vsyncpa [#allocation4], 1

</llo_original>
